<compile_context>
chip_gen: v5e
topology: v5e:2x2
jax: 0.10.0
libtpu: 0.0.40
codegen_flags: <defaults>
</compile_context>

<pallas_src>
import math
from functools import partial

import jax
import jax.numpy as jnp
from jax.experimental import pallas as pl
from jax.experimental.pallas import tpu as pltpu

LN_EPS = 1e-5  # torch.nn.LayerNorm default


def _lqa_kernel(k_ref, v_ref, wq_ref, bs_ref, rexp_ref, pool_ref, rb_ref,
                ln_ref, o_ref):
    """One grid step = BLOCK_B batch elements, fully lane-dense.

    k_ref:     [BB, L, key_dim]          keys   (no bias row)
    v_ref:     [BB, L, embed_dim]        values (no bias row)
    wq_ref:    [L*key_dim, J]            per-chunk learned-query weights (bias cols = 0)
    bs_ref:    [1, J]                    additive bias-row logits (real cols = 0)
    rexp_ref:  [J, L*embed_dim]          chunk-weight -> per-channel expansion (bias rows = 0)
    pool_ref:  [L*embed_dim, embed_dim]  per-head pooling of the weighted value raster
    rb_ref:    [J, embed_dim]            bias-row value contribution (v_bias folded in)
    ln_ref:    [2, embed_dim]            LayerNorm affine (row 0 = gamma, row 1 = beta)
    o_ref:     [BB, embed_dim]
    """
    bb, L, key_dim = k_ref.shape
    embed_dim = v_ref.shape[2]
    J = wq_ref.shape[1]          # (L + 1) * H chunks per batch element
    S = L + 1
    H = J // S

    k_flat = k_ref[...].astype(jnp.float32).reshape(bb, L * key_dim)
    v_flat = v_ref[...].astype(jnp.float32).reshape(bb, L * embed_dim)

    # Per-chunk attention logits (torch raster order) via one MXU matmul; the
    # batch-independent bias-row logits are added as a constant vector.
    scores = jnp.dot(k_flat, wq_ref[...],
                     preferred_element_type=jnp.float32) + bs_ref[...]       # [bb, J]

    # Softmax per head: chunks j in [h*S, (h+1)*S) form head h's group.
    s3 = scores.reshape(bb, H, S)
    m = jnp.max(s3, axis=-1, keepdims=True)
    p = jnp.exp(s3 - m)
    denom = jnp.sum(p, axis=-1, keepdims=True)
    inv = pl.reciprocal(denom, approx=True)
    inv = inv * (2.0 - denom * inv)            # one Newton step -> ~1e-7 rel err
    w = (p * inv).reshape(bb, J)               # [bb, J]

    # Weighted value sum, lane-dense: expand chunk weights to per-channel,
    # multiply by the value raster, pool per head (all MXU / VPU; only the
    # tiny per-head softmax reductions above touch the XLU).
    w_exp = jnp.dot(w, rexp_ref[...], preferred_element_type=jnp.float32)    # [bb, L*embed_dim]
    a = jnp.dot(w_exp * v_flat, pool_ref[...],
                preferred_element_type=jnp.float32)                          # [bb, embed_dim]
    a = a + jnp.dot(w, rb_ref[...], preferred_element_type=jnp.float32)      # + bias-row values

    # LayerNorm over embed_dim (per batch row).
    ln = ln_ref[...]
    gamma = ln[0:1, :]
    beta = ln[1:2, :]
    mean = jnp.mean(a, axis=-1, keepdims=True)
    var = jnp.mean((a - mean) ** 2, axis=-1, keepdims=True)
    a_n = (a - mean) * jax.lax.rsqrt(var + LN_EPS)
    o_ref[...] = (a_n * gamma + beta).astype(o_ref.dtype)


def _choose_block_b(B, L, key_dim, embed_dim, dtype_bytes=4,
                    tile_budget_bytes=12 * 1024 * 1024):
    """Largest layout-friendly batch block that fits the VMEM tile budget."""
    # Double-buffered K/V tiles + output tile per batch element.
    per_b = 2 * (L * key_dim + L * embed_dim + embed_dim) * dtype_bytes
    cap = max(1, tile_budget_bytes // per_b)
    # Prefer a multiple-of-8 divisor of B that leaves >= 2 grid blocks
    # (sublane-aligned output tiles; keeps both v7x TensorCores busy).
    for bb in range(min(B, cap), 0, -1):
        if B % bb == 0 and bb % 8 == 0 and bb < B:
            return bb
    # Small B: take the whole batch in one step (block == full array is always legal).
    return B if B <= cap else 1


def _build_constants(params, L, key_dim, embed_dim, n_heads):
    """Tiny constant matrices that reproduce torch's view-based multihead split.

    torch's .view([B*H, S, C//H]) chops the flattened (seq, channel) raster of
    each batch element (bias row last) into J = S*H contiguous chunks of dk
    (dv) elements; chunk j belongs to head j // S and is scored against
    query[j // S].
    """
    H = n_heads
    dk = key_dim // H
    dv = embed_dim // H
    S = L + 1
    J = S * H
    LH = L * H

    q2 = params["query"].reshape(H, dk).astype(jnp.float32)
    k_bias = params["k_bias"].astype(jnp.float32)
    v_bias = params["v_bias"].astype(jnp.float32)

    head_of_chunk = jnp.arange(J) // S                                   # [J]
    q_per_chunk = q2[head_of_chunk]                                      # [J, dk]

    # Scores weight: W[j*dk + d, j] = query[j//S, d]  (real chunks; bias cols 0).
    eye_real = jnp.eye(J, dtype=jnp.float32)[:LH]                        # [LH, J]
    w_scores = (q_per_chunk[:LH, :, None] * eye_real[:, None, :]).reshape(LH * dk, J)

    # Additive bias-row logits (batch independent); real-chunk columns are 0.
    kb_chunks = k_bias.reshape(H, dk)
    bias_sc = jnp.sum(q_per_chunk[LH:] * kb_chunks, axis=-1)             # [H]
    bs_full = jnp.concatenate([jnp.zeros((LH,), jnp.float32), bias_sc]).reshape(1, J)

    # Chunk-weight -> per-channel expansion (real chunks only).
    r_exp = jnp.concatenate(
        [jnp.repeat(jnp.eye(LH, dtype=jnp.float32), dv, axis=1),
         jnp.zeros((H, LH * dv), jnp.float32)], axis=0)                  # [J, L*embed_dim]

    # Per-head pooling of the weighted value raster.
    one_hot_real = jax.nn.one_hot(head_of_chunk[:LH], H, dtype=jnp.float32)
    pool = jnp.kron(one_hot_real, jnp.eye(dv, dtype=jnp.float32))        # [L*embed_dim, embed_dim]

    # Bias-row value contribution with v_bias folded into the constant.
    one_hot_bias = jax.nn.one_hot(head_of_chunk[LH:], H, dtype=jnp.float32)   # [H, H]
    vb_chunks = v_bias.reshape(H, dv)
    rb = jnp.concatenate(
        [jnp.zeros((LH, embed_dim), jnp.float32),
         (one_hot_bias[:, :, None] * vb_chunks[:, None, :]).reshape(H, embed_dim)],
        axis=0)                                                          # [J, embed_dim]

    # LayerNorm affine packed into one operand: row 0 = gamma, row 1 = beta.
    ln_affine = jnp.stack(
        [params["ln_weight"].astype(jnp.float32),
         params["ln_bias"].astype(jnp.float32)], axis=0)                 # [2, embed_dim]
    return w_scores, bs_full, r_exp, pool, rb, ln_affine


@partial(jax.jit, static_argnames=("n_heads",))
def output_block_forward(keys, values, params, n_heads):
    """keys: [B, L, key_dim], values: [B, L, embed_dim] -> [B, embed_dim] (squeezed)."""
    B, L, key_dim = keys.shape
    embed_dim = values.shape[-1]
    S = L + 1
    J = S * n_heads

    w_scores, bs_full, r_exp, pool, rb, ln_affine = _build_constants(
        params, L, key_dim, embed_dim, n_heads)

    block_b = _choose_block_b(B, L, key_dim, embed_dim)
    grid = (B // block_b,)

    out = pl.pallas_call(
        _lqa_kernel,
        out_shape=jax.ShapeDtypeStruct((B, embed_dim), jnp.float32),
        grid_spec=pltpu.PrefetchScalarGridSpec(
            num_scalar_prefetch=0,
            grid=grid,
            in_specs=[
                pl.BlockSpec((block_b, L, key_dim), lambda b: (b, 0, 0)),
                pl.BlockSpec((block_b, L, embed_dim), lambda b: (b, 0, 0)),
                pl.BlockSpec((L * key_dim, J), lambda b: (0, 0)),
                pl.BlockSpec((1, J), lambda b: (0, 0)),
                pl.BlockSpec((J, L * embed_dim), lambda b: (0, 0)),
                pl.BlockSpec((L * embed_dim, embed_dim), lambda b: (0, 0)),
                pl.BlockSpec((J, embed_dim), lambda b: (0, 0)),
                pl.BlockSpec((2, embed_dim), lambda b: (0, 0)),
            ],
            out_specs=pl.BlockSpec((block_b, embed_dim), lambda b: (b, 0)),
        ),
        compiler_params=pltpu.CompilerParams(
            dimension_semantics=("parallel",),
            vmem_limit_bytes=32 * 1024 * 1024,
        ),
    )(keys, values, w_scores, bs_full, r_exp, pool, rb, ln_affine)

    # OutputBlock.forward: A = th.squeeze(self.LQA(keys, values))
    return jnp.squeeze(out)


def reference(keys, values, params, n_heads):
    """Pure-JAX re-implementation of the PyTorch forward, for verification."""
    B, L, key_dim = keys.shape
    embed_dim = values.shape[-1]
    H = n_heads
    dk, dv = key_dim // H, embed_dim // H
    S = L + 1
    keys_c = jnp.concatenate(
        [keys, jnp.broadcast_to(params["k_bias"], (B, 1, key_dim))], axis=1)
    vals_c = jnp.concatenate(
        [values, jnp.broadcast_to(params["v_bias"], (B, 1, embed_dim))], axis=1)
    K = keys_c.reshape(B * H, S, dk)               # torch .contiguous().view(...)
    V = vals_c.reshape(B * H, S, dv)
    Q = jnp.tile(params["query"], (B, 1, 1))       # [B*H, 1, dk]
    Aw = jnp.einsum("gqd,gsd->gqs", Q, K)          # [B*H, 1, S]
    Aw = jax.nn.softmax(Aw, axis=2)
    A = jnp.einsum("gqs,gsd->gqd", Aw, V)          # [B*H, 1, dv]
    A = A.reshape(B, 1, embed_dim)
    mean = jnp.mean(A, axis=-1, keepdims=True)
    var = jnp.mean((A - mean) ** 2, axis=-1, keepdims=True)
    A = (A - mean) / jnp.sqrt(var + LN_EPS) * params["ln_weight"] + params["ln_bias"]
    return jnp.squeeze(A)


if __name__ == "__main__":
    # (B, L, key_dim, embed_dim, n_heads): small case + a blocked multi-grid case.
    configs = [(2, 8, 32, 32, 4), (16, 8, 32, 32, 4)]
    root = jax.random.PRNGKey(0)

    for (B, L, key_dim, embed_dim, n_heads) in configs:
        root, k1, k2, k3, k4, k5 = jax.random.split(root, 6)
        keys_in = jax.random.normal(k1, (B, L, key_dim), dtype=jnp.float32)
        values_in = jax.random.normal(k2, (B, L, embed_dim), dtype=jnp.float32)

        # Module-shaped parameters.  The module zero-initializes query / v_bias
        # (trivial attention); we use deterministic random values so every path
        # (per-head softmax, attn-bias row, value bias) is exercised.
        params = {
            "query": jax.random.normal(k3, (n_heads, 1, key_dim // n_heads), jnp.float32),
            "k_bias": jax.random.normal(k4, (key_dim,), jnp.float32) / math.sqrt(key_dim),
            "v_bias": 0.1 * jax.random.normal(k5, (embed_dim,), jnp.float32),
            "ln_weight": jnp.ones((embed_dim,), jnp.float32),   # nn.LayerNorm default
            "ln_bias": jnp.zeros((embed_dim,), jnp.float32),
        }

        out = output_block_forward(keys_in, values_in, params, n_heads)
        out = jax.block_until_ready(out)

        ref = reference(keys_in, values_in, params, n_heads)
        assert out.shape == (B, embed_dim)
        assert jnp.allclose(out, ref, atol=1e-4, rtol=1e-4), (
            f"mismatch vs pure-JAX reference for B={B}: "
            f"max abs err {jnp.max(jnp.abs(out - ref))}")

    print("KERNEL_OK")
</pallas_src>

<mosaic_0001>
module attributes {stable_mosaic.version = 11 : i64} {
  func.func @_lqa_kernel(%arg0: i32, %arg1: memref<2x8x32xf32, #tpu.memory_space<vmem>>, %arg2: memref<2x8x32xf32, #tpu.memory_space<vmem>>, %arg3: memref<256x36xf32, #tpu.memory_space<vmem>>, %arg4: memref<1x36xf32, #tpu.memory_space<vmem>>, %arg5: memref<36x256xf32, #tpu.memory_space<vmem>>, %arg6: memref<256x32xf32, #tpu.memory_space<vmem>>, %arg7: memref<36x32xf32, #tpu.memory_space<vmem>>, %arg8: memref<2x32xf32, #tpu.memory_space<vmem>>, %arg9: memref<2x32xf32, #tpu.memory_space<vmem>>) attributes {dimension_semantics = [#tpu.dimension_semantics<parallel>], iteration_bounds = array<i64: 1>, scalar_prefetch = 0 : i64, scratch_operands = 0 : i64, tpu.core_type = #tpu.core_type<tc>, window_params = [{transform_indices = @transform_0, window_bounds = array<i64: 2, 8, 32>}, {transform_indices = @transform_1, window_bounds = array<i64: 2, 8, 32>}, {pipeline_mode = #tpu.pipeline_mode<synchronous>, transform_indices = @transform_2, window_bounds = array<i64: 256, 36>}, {pipeline_mode = #tpu.pipeline_mode<synchronous>, transform_indices = @transform_3, window_bounds = array<i64: 1, 36>}, {pipeline_mode = #tpu.pipeline_mode<synchronous>, transform_indices = @transform_4, window_bounds = array<i64: 36, 256>}, {pipeline_mode = #tpu.pipeline_mode<synchronous>, transform_indices = @transform_5, window_bounds = array<i64: 256, 32>}, {pipeline_mode = #tpu.pipeline_mode<synchronous>, transform_indices = @transform_6, window_bounds = array<i64: 36, 32>}, {pipeline_mode = #tpu.pipeline_mode<synchronous>, transform_indices = @transform_7, window_bounds = array<i64: 2, 32>}, {transform_indices = @transform_8, window_bounds = array<i64: 2, 32>}]} {
    %c0 = arith.constant 0 : index
    %c0_0 = arith.constant 0 : index
    %c0_1 = arith.constant 0 : index
    %0 = vector.load %arg1[%c0, %c0_0, %c0_1] : memref<2x8x32xf32, #tpu.memory_space<vmem>>, vector<2x8x32xf32>
    %1 = vector.shape_cast %0 : vector<2x8x32xf32> to vector<2x256xf32>
    %c0_2 = arith.constant 0 : index
    %c0_3 = arith.constant 0 : index
    %c0_4 = arith.constant 0 : index
    %2 = vector.load %arg2[%c0_2, %c0_3, %c0_4] : memref<2x8x32xf32, #tpu.memory_space<vmem>>, vector<2x8x32xf32>
    %3 = vector.shape_cast %2 : vector<2x8x32xf32> to vector<2x256xf32>
    %c0_5 = arith.constant 0 : index
    %c0_6 = arith.constant 0 : index
    %4 = vector.load %arg3[%c0_5, %c0_6] : memref<256x36xf32, #tpu.memory_space<vmem>>, vector<256x36xf32>
    %cst = arith.constant dense<0.000000e+00> : vector<2x36xf32>
    %5 = tpu.matmul %1, %4, %cst {dimension_numbers = #tpu.dot_dimension_numbers<[1], [0], [0], [1], [0, 0, 1, 1], [], []>} : vector<2x256xf32>, vector<256x36xf32>, vector<2x36xf32> -> vector<2x36xf32>
    %c0_7 = arith.constant 0 : index
    %c0_8 = arith.constant 0 : index
    %6 = vector.load %arg4[%c0_7, %c0_8] : memref<1x36xf32, #tpu.memory_space<vmem>>, vector<1x36xf32>
    %7 = vector.broadcast %6 : vector<1x36xf32> to vector<2x36xf32>
    %8 = arith.addf %5, %7 : vector<2x36xf32>
    %9 = vector.shape_cast %8 : vector<2x36xf32> to vector<2x4x9xf32>
    %cst_9 = arith.constant dense<0xFF800000> : vector<2x4xf32>
    %10 = vector.multi_reduction <maximumf>, %9, %cst_9 [2] : vector<2x4x9xf32> to vector<2x4xf32>
    %11 = vector.shape_cast %10 : vector<2x4xf32> to vector<2x4x1xf32>
    %12 = vector.broadcast %11 : vector<2x4x1xf32> to vector<2x4x9xf32>
    %13 = arith.subf %9, %12 : vector<2x4x9xf32>
    %14 = math.exp %13 : vector<2x4x9xf32>
    %cst_10 = arith.constant dense<0.000000e+00> : vector<2x4xf32>
    %15 = vector.multi_reduction <add>, %14, %cst_10 [2] : vector<2x4x9xf32> to vector<2x4xf32>
    %16 = vector.shape_cast %15 : vector<2x4xf32> to vector<2x4x1xf32>
    %17 = tpu.reciprocal %16 {approx = true} : vector<2x4x1xf32> -> vector<2x4x1xf32>
    %18 = arith.mulf %16, %17 : vector<2x4x1xf32>
    %cst_11 = arith.constant 2.000000e+00 : f32
    %19 = vector.broadcast %cst_11 : f32 to vector<2x4x1xf32>
    %20 = arith.subf %19, %18 : vector<2x4x1xf32>
    %21 = arith.mulf %17, %20 : vector<2x4x1xf32>
    %22 = vector.broadcast %21 : vector<2x4x1xf32> to vector<2x4x9xf32>
    %23 = arith.mulf %14, %22 : vector<2x4x9xf32>
    %24 = vector.shape_cast %23 : vector<2x4x9xf32> to vector<2x36xf32>
    %c0_12 = arith.constant 0 : index
    %c0_13 = arith.constant 0 : index
    %25 = vector.load %arg5[%c0_12, %c0_13] : memref<36x256xf32, #tpu.memory_space<vmem>>, vector<36x256xf32>
    %cst_14 = arith.constant dense<0.000000e+00> : vector<2x256xf32>
    %26 = tpu.matmul %24, %25, %cst_14 {dimension_numbers = #tpu.dot_dimension_numbers<[1], [0], [0], [1], [0, 0, 1, 1], [], []>} : vector<2x36xf32>, vector<36x256xf32>, vector<2x256xf32> -> vector<2x256xf32>
    %27 = arith.mulf %26, %3 : vector<2x256xf32>
    %c0_15 = arith.constant 0 : index
    %c0_16 = arith.constant 0 : index
    %28 = vector.load %arg6[%c0_15, %c0_16] : memref<256x32xf32, #tpu.memory_space<vmem>>, vector<256x32xf32>
    %cst_17 = arith.constant dense<0.000000e+00> : vector<2x32xf32>
    %29 = tpu.matmul %27, %28, %cst_17 {dimension_numbers = #tpu.dot_dimension_numbers<[1], [0], [0], [1], [0, 0, 1, 1], [], []>} : vector<2x256xf32>, vector<256x32xf32>, vector<2x32xf32> -> vector<2x32xf32>
    %c0_18 = arith.constant 0 : index
    %c0_19 = arith.constant 0 : index
    %30 = vector.load %arg7[%c0_18, %c0_19] : memref<36x32xf32, #tpu.memory_space<vmem>>, vector<36x32xf32>
    %cst_20 = arith.constant dense<0.000000e+00> : vector<2x32xf32>
    %31 = tpu.matmul %24, %30, %cst_20 {dimension_numbers = #tpu.dot_dimension_numbers<[1], [0], [0], [1], [0, 0, 1, 1], [], []>} : vector<2x36xf32>, vector<36x32xf32>, vector<2x32xf32> -> vector<2x32xf32>
    %32 = arith.addf %29, %31 : vector<2x32xf32>
    %c0_21 = arith.constant 0 : index
    %c0_22 = arith.constant 0 : index
    %33 = vector.load %arg8[%c0_21, %c0_22] : memref<2x32xf32, #tpu.memory_space<vmem>>, vector<2x32xf32>
    %34 = vector.extract_strided_slice %33 {offsets = [0, 0], sizes = [1, 32], strides = [1, 1]} : vector<2x32xf32> to vector<1x32xf32>
    %35 = vector.extract_strided_slice %33 {offsets = [1, 0], sizes = [1, 32], strides = [1, 1]} : vector<2x32xf32> to vector<1x32xf32>
    %cst_23 = arith.constant dense<0.000000e+00> : vector<2xf32>
    %36 = vector.multi_reduction <add>, %32, %cst_23 [1] : vector<2x32xf32> to vector<2xf32>
    %37 = vector.shape_cast %36 : vector<2xf32> to vector<2x1xf32>
    %cst_24 = arith.constant 3.200000e+01 : f32
    %38 = vector.broadcast %cst_24 : f32 to vector<2x1xf32>
    %39 = arith.divf %37, %38 : vector<2x1xf32>
    %40 = vector.broadcast %39 : vector<2x1xf32> to vector<2x32xf32>
    %41 = arith.subf %32, %40 : vector<2x32xf32>
    %42 = arith.mulf %41, %41 : vector<2x32xf32>
    %cst_25 = arith.constant dense<0.000000e+00> : vector<2xf32>
    %43 = vector.multi_reduction <add>, %42, %cst_25 [1] : vector<2x32xf32> to vector<2xf32>
    %44 = vector.shape_cast %43 : vector<2xf32> to vector<2x1xf32>
    %cst_26 = arith.constant 3.200000e+01 : f32
    %45 = vector.broadcast %cst_26 : f32 to vector<2x1xf32>
    %46 = arith.divf %44, %45 : vector<2x1xf32>
    %47 = vector.broadcast %39 : vector<2x1xf32> to vector<2x32xf32>
    %48 = arith.subf %32, %47 : vector<2x32xf32>
    %cst_27 = arith.constant 9.99999974E-6 : f32
    %49 = vector.broadcast %cst_27 : f32 to vector<2x1xf32>
    %50 = arith.addf %46, %49 : vector<2x1xf32>
    %51 = math.rsqrt %50 : vector<2x1xf32>
    %52 = vector.broadcast %51 : vector<2x1xf32> to vector<2x32xf32>
    %53 = arith.mulf %48, %52 : vector<2x32xf32>
    %54 = vector.broadcast %34 : vector<1x32xf32> to vector<2x32xf32>
    %55 = arith.mulf %53, %54 : vector<2x32xf32>
    %56 = vector.broadcast %35 : vector<1x32xf32> to vector<2x32xf32>
    %57 = arith.addf %55, %56 : vector<2x32xf32>
    %c0_28 = arith.constant 0 : index
    %c0_29 = arith.constant 0 : index
    %58 = vector.load %arg9[%c0_28, %c0_29] : memref<2x32xf32, #tpu.memory_space<vmem>>, vector<2x32xf32>
    tpu.vector_store %arg9[%c0_28, %c0_29], %57 {strides = array<i32>} : memref<2x32xf32, #tpu.memory_space<vmem>>, vector<2x32xf32>,
    return
  }
  func.func @transform_0(%arg0: i32) -> (i32, i32, i32) {
    %c0_i32 = arith.constant 0 : i32
    %c0_i32_0 = arith.constant 0 : i32
    %c0_i32_1 = arith.constant 0 : i32
    return %arg0, %c0_i32, %c0_i32_0 : i32, i32, i32
  }
  func.func @transform_1(%arg0: i32) -> (i32, i32, i32) {
    %c0_i32 = arith.constant 0 : i32
    %c0_i32_0 = arith.constant 0 : i32
    %c0_i32_1 = arith.constant 0 : i32
    return %arg0, %c0_i32, %c0_i32_0 : i32, i32, i32
  }
  func.func @transform_2(%arg0: i32) -> (i32, i32) {
    %c0_i32 = arith.constant 0 : i32
    %c0_i32_0 = arith.constant 0 : i32
    %c0_i32_1 = arith.constant 0 : i32
    return %c0_i32, %c0_i32_0 : i32, i32
  }
  func.func @transform_3(%arg0: i32) -> (i32, i32) {
    %c0_i32 = arith.constant 0 : i32
    %c0_i32_0 = arith.constant 0 : i32
    %c0_i32_1 = arith.constant 0 : i32
    return %c0_i32, %c0_i32_0 : i32, i32
  }
  func.func @transform_4(%arg0: i32) -> (i32, i32) {
    %c0_i32 = arith.constant 0 : i32
    %c0_i32_0 = arith.constant 0 : i32
    %c0_i32_1 = arith.constant 0 : i32
    return %c0_i32, %c0_i32_0 : i32, i32
  }
  func.func @transform_5(%arg0: i32) -> (i32, i32) {
    %c0_i32 = arith.constant 0 : i32
    %c0_i32_0 = arith.constant 0 : i32
    %c0_i32_1 = arith.constant 0 : i32
    return %c0_i32, %c0_i32_0 : i32, i32
  }
  func.func @transform_6(%arg0: i32) -> (i32, i32) {
    %c0_i32 = arith.constant 0 : i32
    %c0_i32_0 = arith.constant 0 : i32
    %c0_i32_1 = arith.constant 0 : i32
    return %c0_i32, %c0_i32_0 : i32, i32
  }
  func.func @transform_7(%arg0: i32) -> (i32, i32) {
    %c0_i32 = arith.constant 0 : i32
    %c0_i32_0 = arith.constant 0 : i32
    %c0_i32_1 = arith.constant 0 : i32
    return %c0_i32, %c0_i32_0 : i32, i32
  }
  func.func @transform_8(%arg0: i32) -> (i32, i32) {
    %c0_i32 = arith.constant 0 : i32
    %c0_i32_0 = arith.constant 0 : i32
    return %arg0, %c0_i32 : i32, i32
  }
}

</mosaic_0001>

<llo_original>
// kernel: mul.41
$region0: #{mul.41}
  %s0 = inlined_call_operand.vmem [shape: f32[32], index: 0, kind: input, shape index: {}]
  %s1 = inlined_call_operand.vmem [shape: f32[4,8], index: 1, kind: output, shape index: {}]
  $region1: #{mul.41} parent=0
    #allocation0 [shape = 'u8[4096]{0}', space=vmem, size = 0x1000, scoped, tag = 'scoped mem for output reshape']
    #allocation1 [shape = 'u8[4096]{0}', space=vmem, size = 0x1000, scoped, tag = 'scoped mem for input reshape']
    %s3 = ssub.s32 2, 1
    %v4 = vld [vmem:[%s0] sm:%s3]
    %5 = vst [vmem:[#allocation1] sm:%s3] %v4
    %v6 = vld [vmem:[#allocation1] sm:$0x1]
    %vm7 = vcmask 64512
    %8 = vst.msk [vmem:[#allocation0] sm:$0x1] %vm7, %v6
    %v9 = vld [vmem:[#allocation1] sm:$0x1]
    %10 = vrot.lane.b32.xlu0 %v9, 120
    %v11 = vpop.permute.xlu0 %10
    %vm12 = vcmask 64512
    %s13 = scalar_lea.vmem [#allocation0], 1
    %14 = vst.msk [vmem:[%s13] sm:$0x1] %vm12, %v11
    %v15 = vld [vmem:[#allocation1] sm:$0x1]
    %16 = vrot.lane.b32.xlu0 %v15, 112
    %v17 = vpop.permute.xlu0 %16
    %vm18 = vcmask 64512
    %s19 = scalar_lea.vmem [#allocation0], 2
    %20 = vst.msk [vmem:[%s19] sm:$0x1] %vm18, %v17
    %v21 = vld [vmem:[#allocation1] sm:$0x1]
    %22 = vrot.lane.b32.xlu0 %v21, 104
    %v23 = vpop.permute.xlu0 %22
    %vm24 = vcmask 64512
    %s25 = scalar_lea.vmem [#allocation0], 3
    %26 = vst.msk [vmem:[%s25] sm:$0x1] %vm24, %v23
    %s28 = ssub.s32 16, 1
    %v29 = vld [vmem:[#allocation0] sm:%s28]
    %s31 = ssub.s32 16, 1
    %32 = vst [vmem:[%s1] sm:%s31] %v29

// kernel: output_block_forward.1
$region0: #{output_block_forward.1}
  #allocation0 [shape = 'u32[]', space=smem, size = 0x4, offset = 0x4, fixed_abs, tag = 'smem constant byte address 0x4 - core index']
  #allocation1 [shape = 'u32[72,128]{1,0:T(1,128)}', space=vmem, size = 0x9000, scoped, tag = 'internal scratch']
  %s0 = inlined_call_operand.vmem [shape: f32[2,8,32], index: 0, kind: input, shape index: {}]
  %s1 = inlined_call_operand.vmem [shape: f32[2,8,32], index: 1, kind: input, shape index: {}]
  %s2 = inlined_call_operand.vmem [shape: f32[256,36], index: 2, kind: input, shape index: {}]
  %s3 = inlined_call_operand.vmem [shape: f32[1,36], index: 3, kind: input, shape index: {}]
  %s4 = inlined_call_operand.vmem [shape: f32[36,256], index: 4, kind: input, shape index: {}]
  %s5 = inlined_call_operand.vmem [shape: f32[256,32], index: 5, kind: input, shape index: {}]
  %s6 = inlined_call_operand.vmem [shape: f32[36,32], index: 6, kind: input, shape index: {}]
  %s7 = inlined_call_operand.vmem [shape: f32[2,32], index: 7, kind: input, shape index: {}]
  %s8 = inlined_call_operand.hbm [shape: f32[2,32], index: 8, kind: output, shape index: {}]
  %s9 = sld [smem:[#allocation0]]
  $region42: #{output_block_forward.1} parent=0
    _
  %s11 = ssub.s32 1, %s9
  %s12 = scalar_select 0, %s11, %s9
  $region1: #{output_block_forward.1} parent=0
    #allocation2 [shape = 'u8[1024]{0}', space=vmem, size = 0x400, scoped, tag = 'output window, operand 0, single buffered']
    #allocation3 [shape = 's32[1]{0}', space=sflag, size = 0x4, scoped, tag = 'scoped memory for output_block_forward.1']
    %13 = vsyncpa [#allocation3], 0
    // Predicated region
    $region2: #{output_block_forward.1} parent=1 // pred_check
      _
    $region3: #{output_block_forward.1} parent=1 // pred_check_branch
      %15 = sbr.rel (0) target = $region5
    $region4: #{output_block_forward.1} parent=1 // pred_region
      _
    $region5: #{output_block_forward.1} parent=1 // pred_fallthru
      _
    // Predicated region
    $region6: #{output_block_forward.1} parent=1 // pred_check
      _
    $region7: #{output_block_forward.1} parent=1 // pred_check_branch
      %17 = sbr.rel (0) target = $region9
    $region8: #{output_block_forward.1} parent=1 // pred_region
      _
    $region9: #{output_block_forward.1} parent=1 // pred_fallthru
      _
    // Predicated region
    $region10: #{output_block_forward.1} parent=1 // pred_check
      _
    $region11: #{output_block_forward.1} parent=1 // pred_check_branch
      %19 = sbr.rel (0) target = $region13
    $region12: #{output_block_forward.1} parent=1 // pred_region
      _
    $region13: #{output_block_forward.1} parent=1 // pred_fallthru
      _
    // Predicated region
    $region14: #{output_block_forward.1} parent=1 // pred_check
      _
    $region15: #{output_block_forward.1} parent=1 // pred_check_branch
      %21 = sbr.rel (0) target = $region17
    $region16: #{output_block_forward.1} parent=1 // pred_region
      _
    $region17: #{output_block_forward.1} parent=1 // pred_fallthru
      _
    // Predicated region
    $region18: #{output_block_forward.1} parent=1 // pred_check
      _
    $region19: #{output_block_forward.1} parent=1 // pred_check_branch
      %23 = sbr.rel (0) target = $region21
    $region20: #{output_block_forward.1} parent=1 // pred_region
      _
    $region21: #{output_block_forward.1} parent=1 // pred_fallthru
      _
    // Predicated region
    $region22: #{output_block_forward.1} parent=1 // pred_check
      _
    $region23: #{output_block_forward.1} parent=1 // pred_check_branch
      %25 = sbr.rel (0) target = $region25
    $region24: #{output_block_forward.1} parent=1 // pred_region
      _
    $region25: #{output_block_forward.1} parent=1 // pred_fallthru
      _
    // Predicated region
    $region26: #{output_block_forward.1} parent=1 // pred_check
      _
    $region27: #{output_block_forward.1} parent=1 // pred_check_branch
      %27 = sbr.rel (0) target = $region29
    $region28: #{output_block_forward.1} parent=1 // pred_region
      _
    $region29: #{output_block_forward.1} parent=1 // pred_fallthru
      _
    // Predicated region
    $region30: #{output_block_forward.1} parent=1 // pred_check
      _
    $region31: #{output_block_forward.1} parent=1 // pred_check_branch
      %29 = sbr.rel (0) target = $region33
    $region32: #{output_block_forward.1} parent=1 // pred_region
      _
    $region33: #{output_block_forward.1} parent=1 // pred_fallthru
      _
    %v30 = vld [vmem:[%s0] sm:$0xff]
    %v31 = vld [vmem:[%s0 + $0x8] sm:$0xff]
    %v32 = vrot.slane %v30, 4
    %vm33 = vcmask 1047556
    %v34 = vsel %vm33, 0.0, %v32
    %v36 = vunpack.c.l.s4 1983009808
    %v37 = vunpack.c.0.s8 %v36
    %v38 = vperm.slane %v30, %v37
    %v40 = vunpack.c.l.s4 1983009808
    %v41 = vunpack.c.0.s8 %v40
    %v42 = vperm.slane %v34, %v41
    %v43 = vrot.slane %v31, 4
    %v44 = vsel %vm33, 0.0, %v43
    %v46 = vunpack.c.l.s4 1983009808
    %v47 = vunpack.c.0.s8 %v46
    %v48 = vperm.slane %v31, %v47
    %v50 = vunpack.c.l.s4 1983009808
    %v51 = vunpack.c.0.s8 %v50
    %v52 = vperm.slane %v44, %v51
    %v53 = vrot.slane %v48, 4
    %v54 = vsel %vm33, %v53, %v38
    %v55 = vrot.slane %v38, 4
    %v56 = vsel %vm33, %v48, %v55
    %v58 = vunpack.c.l.s4 1934713408
    %v59 = vunpack.c.0.s8 %v58
    %v60 = vperm.slane %v54, %v59
    %v62 = vunpack.c.l.s4 1934713408
    %v63 = vunpack.c.0.s8 %v62
    %v64 = vperm.slane %v56, %v63
    %v65 = vrot.slane %v52, 4
    %v66 = vsel %vm33, %v65, %v42
    %v67 = vrot.slane %v42, 4
    %v68 = vsel %vm33, %v52, %v67
    %v70 = vunpack.c.l.s4 1934713408
    %v71 = vunpack.c.0.s8 %v70
    %v72 = vperm.slane %v66, %v71
    %v74 = vunpack.c.l.s4 1934713408
    %v75 = vunpack.c.0.s8 %v74
    %v76 = vperm.slane %v68, %v75
    %v77 = vrot.slane %v60, 4
    %v78 = vsel %vm33, 0.0, %v77
    %v79 = vrot.slane %v64, 4
    %v80 = vsel %vm33, 0.0, %v79
    %v81 = vrot.slane %v72, 4
    %v82 = vsel %vm33, 0.0, %v81
    %v83 = vrot.slane %v76, 4
    %v84 = vsel %vm33, 0.0, %v83
    %86 = vrot.lane.b32.xlu0 %v78, 32
    %v87 = vpop.permute.xlu0 %86
    %90 = vrot.lane.b32.xlu0 %v64, 64
    %v91 = vpop.permute.xlu0 %90
    %94 = vrot.lane.b32.xlu0 %v80, 96
    %v95 = vpop.permute.xlu0 %94
    %98 = vrot.lane.b32.xlu0 %v82, 32
    %v99 = vpop.permute.xlu0 %98
    %102 = vrot.lane.b32.xlu0 %v76, 64
    %v103 = vpop.permute.xlu0 %102
    %106 = vrot.lane.b32.xlu0 %v84, 96
    %v107 = vpop.permute.xlu0 %106
    %vm109 = vcmask 261120
    %v110 = vsel %vm109, %v60, %v87
    %vm111 = vcmask 523264
    %v112 = vsel %vm111, %v110, %v91
    %vm113 = vcmask 785408
    %v114 = vsel %vm113, %v112, %v95
    %v115 = vsel %vm109, %v72, %v99
    %v116 = vsel %vm111, %v115, %v103
    %v117 = vsel %vm113, %v116, %v107
    %v118 = vld [vmem:[%s1] sm:$0xff]
    %v119 = vld [vmem:[%s1 + $0x8] sm:$0xff]
    %v120 = vrot.slane %v118, 4
    %v121 = vsel %vm33, 0.0, %v120
    %v123 = vunpack.c.l.s4 1983009808
    %v124 = vunpack.c.0.s8 %v123
    %v125 = vperm.slane %v118, %v124
    %v127 = vunpack.c.l.s4 1983009808
    %v128 = vunpack.c.0.s8 %v127
    %v129 = vperm.slane %v121, %v128
    %v130 = vrot.slane %v119, 4
    %v131 = vsel %vm33, 0.0, %v130
    %v133 = vunpack.c.l.s4 1983009808
    %v134 = vunpack.c.0.s8 %v133
    %v135 = vperm.slane %v119, %v134
    %v137 = vunpack.c.l.s4 1983009808
    %v138 = vunpack.c.0.s8 %v137
    %v139 = vperm.slane %v131, %v138
    %v140 = vrot.slane %v135, 4
    %v141 = vsel %vm33, %v140, %v125
    %v142 = vrot.slane %v125, 4
    %v143 = vsel %vm33, %v135, %v142
    %v145 = vunpack.c.l.s4 1934713408
    %v146 = vunpack.c.0.s8 %v145
    %v147 = vperm.slane %v141, %v146
    %v149 = vunpack.c.l.s4 1934713408
    %v150 = vunpack.c.0.s8 %v149
    %v151 = vperm.slane %v143, %v150
    %v152 = vrot.slane %v139, 4
    %v153 = vsel %vm33, %v152, %v129
    %v154 = vrot.slane %v129, 4
    %v155 = vsel %vm33, %v139, %v154
    %v157 = vunpack.c.l.s4 1934713408
    %v158 = vunpack.c.0.s8 %v157
    %v159 = vperm.slane %v153, %v158
    %v161 = vunpack.c.l.s4 1934713408
    %v162 = vunpack.c.0.s8 %v161
    %v163 = vperm.slane %v155, %v162
    %v164 = vrot.slane %v147, 4
    %v165 = vsel %vm33, 0.0, %v164
    %v166 = vrot.slane %v151, 4
    %v167 = vsel %vm33, 0.0, %v166
    %v168 = vrot.slane %v159, 4
    %v169 = vsel %vm33, 0.0, %v168
    %v170 = vrot.slane %v163, 4
    %v171 = vsel %vm33, 0.0, %v170
    %173 = vrot.lane.b32.xlu0 %v165, 32
    %v174 = vpop.permute.xlu0 %173
    %177 = vrot.lane.b32.xlu0 %v151, 64
    %v178 = vpop.permute.xlu0 %177
    %181 = vrot.lane.b32.xlu0 %v167, 96
    %v182 = vpop.permute.xlu0 %181
    %185 = vrot.lane.b32.xlu0 %v169, 32
    %v186 = vpop.permute.xlu0 %185
    %189 = vrot.lane.b32.xlu0 %v163, 64
    %v190 = vpop.permute.xlu0 %189
    %193 = vrot.lane.b32.xlu0 %v171, 96
    %v194 = vpop.permute.xlu0 %193
    %v196 = vsel %vm109, %v147, %v174
    %v197 = vsel %vm111, %v196, %v178
    %v198 = vsel %vm113, %v197, %v182
    %v199 = vsel %vm109, %v159, %v186
    %v200 = vsel %vm111, %v199, %v190
    %v201 = vsel %vm113, %v200, %v194
    %v202 = vld [vmem:[%s2] sm:$0xff]
    %v203 = vld [vmem:[%s2 + $0x8] sm:$0xff]
    %v204 = vld [vmem:[%s2 + $0x10] sm:$0xff]
    %v205 = vld [vmem:[%s2 + $0x18] sm:$0xff]
    %v206 = vld [vmem:[%s2 + $0x20] sm:$0xff]
    %v207 = vld [vmem:[%s2 + $0x28] sm:$0xff]
    %v208 = vld [vmem:[%s2 + $0x30] sm:$0xff]
    %v209 = vld [vmem:[%s2 + $0x38] sm:$0xff]
    %v210 = vld [vmem:[%s2 + $0x40] sm:$0xff]
    %v211 = vld [vmem:[%s2 + $0x48] sm:$0xff]
    %v212 = vld [vmem:[%s2 + $0x50] sm:$0xff]
    %v213 = vld [vmem:[%s2 + $0x58] sm:$0xff]
    %v214 = vld [vmem:[%s2 + $0x60] sm:$0xff]
    %v215 = vld [vmem:[%s2 + $0x68] sm:$0xff]
    %v216 = vld [vmem:[%s2 + $0x70] sm:$0xff]
    %v217 = vld [vmem:[%s2 + $0x78] sm:$0xff]
    %v218 = vld [vmem:[%s2 + $0x80] sm:$0xff]
    %v219 = vld [vmem:[%s2 + $0x88] sm:$0xff]
    %v220 = vld [vmem:[%s2 + $0x90] sm:$0xff]
    %v221 = vld [vmem:[%s2 + $0x98] sm:$0xff]
    %v222 = vld [vmem:[%s2 + $0xa0] sm:$0xff]
    %v223 = vld [vmem:[%s2 + $0xa8] sm:$0xff]
    %v224 = vld [vmem:[%s2 + $0xb0] sm:$0xff]
    %v225 = vld [vmem:[%s2 + $0xb8] sm:$0xff]
    %v226 = vld [vmem:[%s2 + $0xc0] sm:$0xff]
    %v227 = vld [vmem:[%s2 + $0xc8] sm:$0xff]
    %v228 = vld [vmem:[%s2 + $0xd0] sm:$0xff]
    %v229 = vld [vmem:[%s2 + $0xd8] sm:$0xff]
    %v230 = vld [vmem:[%s2 + $0xe0] sm:$0xff]
    %v231 = vld [vmem:[%s2 + $0xe8] sm:$0xff]
    %v232 = vld [vmem:[%s2 + $0xf0] sm:$0xff]
    %v233 = vld [vmem:[%s2 + $0xf8] sm:$0xff]
    %v234 = vld [vmem:[%s3] sm:$0x1]
    %v236 = vperm.slane %v234, 0
    %238 = vmatpush.msra.mxu0 %v217
    %239 = vmatpush.msra.mxu0 %v216
    %240 = vmatpush.msra.mxu0 %v215
    %241 = vmatpush.msra.mxu0 %v214
    %242 = vmatpush.msra.mxu0 %v213
    %243 = vmatpush.msra.mxu0 %v212
    %244 = vmatpush.msra.mxu0 %v211
    %245 = vmatpush.msra.mxu0 %v210
    %246 = vmatpush.msra.mxu0 %v209
    %247 = vmatpush.msra.mxu0 %v208
    %248 = vmatpush.msra.mxu0 %v207
    %249 = vmatpush.msra.mxu0 %v206
    %250 = vmatpush.msra.mxu0 %v205
    %251 = vmatpush.msra.mxu0 %v204
    %252 = vmatpush.msra.mxu0 %v203
    %253 = vmatpush.msra.mxu0 %v202
    %254 = vmatmul.f32.gmra.mxu0 %v114
    %v255 = vpop.f32.mrf.mxu0
    %v256 = vadd.f32 %v236, %v255
    %257 = vdwg.mxu0
    %258 = vmatpush.msra.mxu0 %v233
    %259 = vmatpush.msra.mxu0 %v232
    %260 = vmatpush.msra.mxu0 %v231
    %261 = vmatpush.msra.mxu0 %v230
    %262 = vmatpush.msra.mxu0 %v229
    %263 = vmatpush.msra.mxu0 %v228
    %264 = vmatpush.msra.mxu0 %v227
    %265 = vmatpush.msra.mxu0 %v226
    %266 = vmatpush.msra.mxu0 %v225
    %267 = vmatpush.msra.mxu0 %v224
    %268 = vmatpush.msra.mxu0 %v223
    %269 = vmatpush.msra.mxu0 %v222
    %270 = vmatpush.msra.mxu0 %v221
    %271 = vmatpush.msra.mxu0 %v220
    %272 = vmatpush.msra.mxu0 %v219
    %273 = vmatpush.msra.mxu0 %v218
    %274 = vmatmul.f32.gmra.mxu0 %v117
    %v275 = vpop.f32.mrf.mxu0
    %v276 = vadd.f32 %v256, %v275
    %277 = vdwg.mxu0
    %279 = vrot.lane.b32.xlu0 %v276, 119
    %v280 = vpop.permute.xlu0 %279
    %282 = vrot.lane.b32.xlu0 %v276, 110
    %v283 = vpop.permute.xlu0 %282
    %285 = vrot.lane.b32.xlu0 %v276, 101
    %v286 = vpop.permute.xlu0 %285
    %v288 = vrot.slane %v283, 4
    %v289 = vsel %vm33, %v288, %v276
    %v291 = vunpack.c.l.s4 1983009808
    %v292 = vunpack.c.0.s8 %v291
    %v293 = vperm.slane %v289, %v292
    %v294 = vrot.slane %v286, 4
    %v295 = vsel %vm33, %v294, %v280
    %v297 = vunpack.c.l.s4 1983009808
    %v298 = vunpack.c.0.s8 %v297
    %v299 = vperm.slane %v295, %v298
    %v300 = vrot.slane %v299, 4
    %v301 = vsel %vm33, %v300, %v293
    %v303 = vunpack.c.l.s4 1934713408
    %v304 = vunpack.c.0.s8 %v303
    %v305 = vperm.slane %v301, %v304
    %v306 = vrot.slane %v305, 4
    %v307 = vsel %vm33, 0.0, %v306
    %vm308 = vcmask 68608
    %v309 = vsel %vm308, %v305, -inf
    %310 = vmax.xlane.f32.xlu0 %v309
    %v311 = vpop.xlane.xlu0 %310
    %v312 = vsel %vm308, %v307, -inf
    %313 = vmax.xlane.f32.xlu0 %v312
    %v314 = vpop.xlane.xlu0 %313
    %v315 = vsub.f32 %v305, %v311
    %v316 = vsub.f32 %v307, %v314
    %v317 = vmul.f32 %v315, 1.442695
    %v318 = vpow.pop %v317
    %v319 = vmul.f32 %v316, 1.442695
    %v320 = vpow.pop %v319
    %v321 = vsel %vm308, %v318, 0.0
    %322 = vadd.xlane.f32.xlu0 %v321
    %v323 = vpop.xlane.xlu0 %322
    %v324 = vsel %vm308, %v320, 0.0
    %325 = vadd.xlane.f32.xlu0 %v324
    %v326 = vpop.xlane.xlu0 %325
    %v327 = vrcp.pop %v323
    %v328 = vrcp.pop %v326
    %v329 = vmul.f32 %v323, %v327
    %v330 = vmul.f32 %v326, %v328
    %v331 = vsub.f32 2.0, %v329
    %v332 = vsub.f32 2.0, %v330
    %v333 = vmul.f32 %v327, %v331
    %v334 = vmul.f32 %v328, %v332
    %v335 = vmul.f32 %v318, %v333
    %v337 = vunpack.c.l.s4 1983009808
    %v338 = vunpack.c.0.s8 %v337
    %v339 = vperm.slane %v335, %v338
    %v340 = vmul.f32 %v320, %v334
    %v342 = vunpack.c.l.s4 1983009808
    %v343 = vunpack.c.0.s8 %v342
    %v344 = vperm.slane %v340, %v343
    %v345 = vrot.slane %v344, 4
    %v346 = vsel %vm33, %v345, %v339
    %v347 = vrot.slane %v339, 4
    %v348 = vsel %vm33, %v344, %v347
    %v350 = vunpack.c.l.s4 1934713408
    %v351 = vunpack.c.0.s8 %v350
    %v352 = vperm.slane %v346, %v351
    %v354 = vunpack.c.l.s4 1934713408
    %v355 = vunpack.c.0.s8 %v354
    %v356 = vperm.slane %v348, %v355
    %v357 = vrot.slane %v352, 4
    %v358 = vsel %vm33, 0.0, %v357
    %v359 = vrot.slane %v356, 4
    %v360 = vsel %vm33, 0.0, %v359
    %362 = vrot.lane.b32.xlu0 %v358, 9
    %v363 = vpop.permute.xlu0 %362
    %366 = vrot.lane.b32.xlu0 %v356, 18
    %v367 = vpop.permute.xlu0 %366
    %370 = vrot.lane.b32.xlu0 %v360, 27
    %v371 = vpop.permute.xlu0 %370
    %vm373 = vcmask 72704
    %v374 = vsel %vm373, %v352, %v363
    %vm375 = vcmask 146432
    %v376 = vsel %vm375, %v374, %v367
    %vm377 = vcmask 220160
    %v378 = vsel %vm377, %v376, %v371
    %v379 = vld [vmem:[%s4] sm:$0xff]
    %v380 = vld [vmem:[%s4 + $0x8] sm:$0xff]
    %v381 = vld [vmem:[%s4 + $0x10] sm:$0xff]
    %v382 = vld [vmem:[%s4 + $0x18] sm:$0xff]
    %v383 = vld [vmem:[%s4 + $0x20] sm:$0xff]
    %v384 = vld [vmem:[%s4 + $0x28] sm:$0xff]
    %v385 = vld [vmem:[%s4 + $0x30] sm:$0xff]
    %v386 = vld [vmem:[%s4 + $0x38] sm:$0xff]
    %v387 = vld [vmem:[%s4 + $0x40] sm:$0xf]
    %v388 = vld [vmem:[%s4 + $0x48] sm:$0xf]
    %vm389 = vcmask 293888
    %v391 = vsel %vm389, %v378, 0
    %vm393 = vcmask 1043456
    %v395 = vsel %vm393, %v387, 0
    %v398 = vsel %vm393, %v388, 0
    %400 = vmatpush.msra.mxu0 0.0
    %401 = vmatpush.msra.mxu0 0.0
    %402 = vmatpush.msra.mxu0 0.0
    %403 = vmatpush.msra.mxu0 0.0
    %404 = vmatpush.msra.mxu0 0.0
    %405 = vmatpush.msra.mxu0 0.0
    %406 = vmatpush.msra.mxu0 0.0
    %407 = vmatpush.msra.mxu0 0.0
    %408 = vmatpush.msra.mxu0 0.0
    %409 = vmatpush.msra.mxu0 0.0
    %410 = vmatpush.msra.mxu0 0.0
    %411 = vmatpush.msra.mxu0 %v395
    %412 = vmatpush.msra.mxu0 %v385
    %413 = vmatpush.msra.mxu0 %v383
    %414 = vmatpush.msra.mxu0 %v381
    %415 = vmatpush.msra.mxu0 %v379
    %416 = vmatmul.f32.gmra.mxu0 %v391
    %v417 = vpop.f32.mrf.mxu0
    %v418 = vadd.f32 0.0, %v417
    %419 = vdwg.mxu0
    %420 = vmatpush.msra.mxu0 0.0
    %421 = vmatpush.msra.mxu0 0.0
    %422 = vmatpush.msra.mxu0 0.0
    %423 = vmatpush.msra.mxu0 0.0
    %424 = vmatpush.msra.mxu0 0.0
    %425 = vmatpush.msra.mxu0 0.0
    %426 = vmatpush.msra.mxu0 0.0
    %427 = vmatpush.msra.mxu0 0.0
    %428 = vmatpush.msra.mxu0 0.0
    %429 = vmatpush.msra.mxu0 0.0
    %430 = vmatpush.msra.mxu0 0.0
    %431 = vmatpush.msra.mxu0 %v398
    %432 = vmatpush.msra.mxu0 %v386
    %433 = vmatpush.msra.mxu0 %v384
    %434 = vmatpush.msra.mxu0 %v382
    %435 = vmatpush.msra.mxu0 %v380
    %436 = vmatmul.f32.gmra.mxu0 %v391
    %v437 = vpop.f32.mrf.mxu0
    %v438 = vadd.f32 0.0, %v437
    %439 = vdwg.mxu0
    %v440 = vmul.f32 %v418, %v198
    %v441 = vmul.f32 %v438, %v201
    %v442 = vld [vmem:[%s5] sm:$0xff]
    %v443 = vld [vmem:[%s5 + $0x8] sm:$0xff]
    %v444 = vld [vmem:[%s5 + $0x10] sm:$0xff]
    %v445 = vld [vmem:[%s5 + $0x18] sm:$0xff]
    %v446 = vld [vmem:[%s5 + $0x20] sm:$0xff]
    %v447 = vld [vmem:[%s5 + $0x28] sm:$0xff]
    %v448 = vld [vmem:[%s5 + $0x30] sm:$0xff]
    %v449 = vld [vmem:[%s5 + $0x38] sm:$0xff]
    %v450 = vld [vmem:[%s5 + $0x40] sm:$0xff]
    %v451 = vld [vmem:[%s5 + $0x48] sm:$0xff]
    %v452 = vld [vmem:[%s5 + $0x50] sm:$0xff]
    %v453 = vld [vmem:[%s5 + $0x58] sm:$0xff]
    %v454 = vld [vmem:[%s5 + $0x60] sm:$0xff]
    %v455 = vld [vmem:[%s5 + $0x68] sm:$0xff]
    %v456 = vld [vmem:[%s5 + $0x70] sm:$0xff]
    %v457 = vld [vmem:[%s5 + $0x78] sm:$0xff]
    %v458 = vld [vmem:[%s5 + $0x80] sm:$0xff]
    %v459 = vld [vmem:[%s5 + $0x88] sm:$0xff]
    %v460 = vld [vmem:[%s5 + $0x90] sm:$0xff]
    %v461 = vld [vmem:[%s5 + $0x98] sm:$0xff]
    %v462 = vld [vmem:[%s5 + $0xa0] sm:$0xff]
    %v463 = vld [vmem:[%s5 + $0xa8] sm:$0xff]
    %v464 = vld [vmem:[%s5 + $0xb0] sm:$0xff]
    %v465 = vld [vmem:[%s5 + $0xb8] sm:$0xff]
    %v466 = vld [vmem:[%s5 + $0xc0] sm:$0xff]
    %v467 = vld [vmem:[%s5 + $0xc8] sm:$0xff]
    %v468 = vld [vmem:[%s5 + $0xd0] sm:$0xff]
    %v469 = vld [vmem:[%s5 + $0xd8] sm:$0xff]
    %v470 = vld [vmem:[%s5 + $0xe0] sm:$0xff]
    %v471 = vld [vmem:[%s5 + $0xe8] sm:$0xff]
    %v472 = vld [vmem:[%s5 + $0xf0] sm:$0xff]
    %v473 = vld [vmem:[%s5 + $0xf8] sm:$0xff]
    %v474 = vld [vmem:[%s6] sm:$0xff]
    %v475 = vld [vmem:[%s6 + $0x8] sm:$0xff]
    %v476 = vld [vmem:[%s6 + $0x10] sm:$0xff]
    %v477 = vld [vmem:[%s6 + $0x18] sm:$0xff]
    %v478 = vld [vmem:[%s6 + $0x20] sm:$0xf]
    %v480 = vsel %vm393, %v478, 0
    %482 = vmatpush.msra.mxu0 0.0
    %483 = vmatpush.msra.mxu0 0.0
    %484 = vmatpush.msra.mxu0 0.0
    %485 = vmatpush.msra.mxu0 0.0
    %486 = vmatpush.msra.mxu0 0.0
    %487 = vmatpush.msra.mxu0 0.0
    %488 = vmatpush.msra.mxu0 0.0
    %489 = vmatpush.msra.mxu0 0.0
    %490 = vmatpush.msra.mxu0 0.0
    %491 = vmatpush.msra.mxu0 0.0
    %492 = vmatpush.msra.mxu0 0.0
    %493 = vmatpush.msra.mxu0 %v480
    %494 = vmatpush.msra.mxu0 %v477
    %495 = vmatpush.msra.mxu0 %v476
    %496 = vmatpush.msra.mxu0 %v475
    %497 = vmatpush.msra.mxu0 %v474
    %498 = vmatmul.f32.gmra.mxu0 %v391
    %v499 = vpop.f32.mrf.mxu0
    %v500 = vadd.f32 0.0, %v499
    %501 = vdwg.mxu0
    %502 = vmatpush.msra.mxu0 %v457
    %503 = vmatpush.msra.mxu0 %v456
    %504 = vmatpush.msra.mxu0 %v455
    %505 = vmatpush.msra.mxu0 %v454
    %506 = vmatpush.msra.mxu0 %v453
    %507 = vmatpush.msra.mxu0 %v452
    %508 = vmatpush.msra.mxu0 %v451
    %509 = vmatpush.msra.mxu0 %v450
    %510 = vmatpush.msra.mxu0 %v449
    %511 = vmatpush.msra.mxu0 %v448
    %512 = vmatpush.msra.mxu0 %v447
    %513 = vmatpush.msra.mxu0 %v446
    %514 = vmatpush.msra.mxu0 %v445
    %515 = vmatpush.msra.mxu0 %v444
    %516 = vmatpush.msra.mxu0 %v443
    %517 = vmatpush.msra.mxu0 %v442
    %518 = vmatmul.f32.gmra.mxu0 %v440
    %v519 = vpop.f32.mrf.mxu0
    %v520 = vadd.f32 %v500, %v519
    %521 = vdwg.mxu0
    %522 = vmatpush.msra.mxu0 %v473
    %523 = vmatpush.msra.mxu0 %v472
    %524 = vmatpush.msra.mxu0 %v471
    %525 = vmatpush.msra.mxu0 %v470
    %526 = vmatpush.msra.mxu0 %v469
    %527 = vmatpush.msra.mxu0 %v468
    %528 = vmatpush.msra.mxu0 %v467
    %529 = vmatpush.msra.mxu0 %v466
    %530 = vmatpush.msra.mxu0 %v465
    %531 = vmatpush.msra.mxu0 %v464
    %532 = vmatpush.msra.mxu0 %v463
    %533 = vmatpush.msra.mxu0 %v462
    %534 = vmatpush.msra.mxu0 %v461
    %535 = vmatpush.msra.mxu0 %v460
    %536 = vmatpush.msra.mxu0 %v459
    %537 = vmatpush.msra.mxu0 %v458
    %538 = vmatmul.f32.gmra.mxu0 %v441
    %v539 = vpop.f32.mrf.mxu0
    %v540 = vadd.f32 %v520, %v539
    %541 = vdwg.mxu0
    %v542 = vld [vmem:[%s7] sm:$0x3]
    %vm543 = vcmask 254976
    %v544 = vsel %vm543, %v540, 0.0
    %545 = vadd.xlane.f32.xlu0 %v544
    %v546 = vpop.xlane.xlu0 %545
    %v547 = vrcp.pop 32.0
    %v548 = vmul.f32 32.0, %v547
    %v549 = vsub.f32 1.0, %v548
    %v550 = vmul.f32 %v547, %v549
    %v551 = vadd.f32 %v547, %v550
    %vm552 = vweird.f32 %v547
    %v553 = vsel %vm552, %v547, %v551
    %v554 = vmul.f32 %v546, %v553
    %v555 = vsub.f32 %v540, %v554
    %v556 = vmul.f32 %v555, %v555
    %v557 = vsel %vm543, %v556, 0.0
    %558 = vadd.xlane.f32.xlu0 %v557
    %v559 = vpop.xlane.xlu0 %558
    %v560 = vmul.f32 %v559, %v553
    %v561 = vadd.f32 %v560, 1e-05
    %v562 = vrsqrt.pop %v561
    %v563 = vmul.f32 %v562, %v561
    %v564 = vmul.f32 %v563, %v562
    %v565 = vmul.f32 0.5, %v564
    %v566 = vsub.f32 1.5, %v565
    %v567 = vmul.f32 %v562, %v566
    %vm568 = vweird.f32 %v561
    %vm569 = vweird.f32 %v562
    %vm570 = vmor %vm568, %vm569
    %v571 = vsel %vm570, %v562, %v567
    %v572 = vmul.f32 %v555, %v571
    %v573 = vperm.slane %v542, 0
    %v574 = vmul.f32 %v572, %v573
    %v575 = vperm.slane %v542, 1
    %v576 = vadd.f32 %v574, %v575
    %577 = vst.msk [vmem:[#allocation2] sm:$0x3] %vm543, %v576
    // Predicated region
    $region34: #{output_block_forward.1} parent=1 // pred_check
      _
    $region35: #{output_block_forward.1} parent=1 // pred_check_branch
      %579 = sbr.rel (0) target = $region37
    $region36: #{output_block_forward.1} parent=1 // pred_region
      %581 = vsyncadd [#allocation3], 0
      %s583 = sshll.u32 [#allocation2], 4
      %s584 = int_to_ptr.vmem [resolvable:$true] %s583
      %s585 = sshll.u32 %s8, 4
      %s586 = int_to_ptr.hbm [resolvable:$true] %s585
      %588 = dma.vmem_to_hbm [thread:$0]  %s584, 32, %s586, [#allocation3]
    $region37: #{output_block_forward.1} parent=1 // pred_fallthru
      _
    // Predicated region
    $region38: #{output_block_forward.1} parent=1 // pred_check
      _
    $region39: #{output_block_forward.1} parent=1 // pred_check_branch
      %590 = sbr.rel (0) target = $region41
    $region40: #{output_block_forward.1} parent=1 // pred_region
      %592 = dma.done [#allocation3], 32
    $region41: #{output_block_forward.1} parent=1 // pred_fallthru
      _
    %593 = vsyncpa [#allocation3], 1

</llo_original>
